<compile_context>
chip_gen: v7x
topology: tpu7x:2x2x1
jax: 0.10.0
libtpu: 0.0.40
codegen_flags: <defaults>
</compile_context>

<pallas_src>
import math
from functools import partial

import numpy as np
import jax
import jax.numpy as jnp
from jax.experimental import pallas as pl
from jax.experimental.pallas import tpu as pltpu


# ---------------------------------------------------------------------------
# Schedules (host-side python glue; equivalent of hypernerf-style `from_dict`)
# ---------------------------------------------------------------------------
class ConstantSchedule:
    def __init__(self, value):
        self.value = float(value)

    def get(self, step):
        return self.value


class LinearSchedule:
    def __init__(self, initial_value, final_value, num_steps):
        self.initial_value = float(initial_value)
        self.final_value = float(final_value)
        self.num_steps = int(num_steps)

    def get(self, step):
        if self.num_steps == 0:
            return self.final_value
        a = min(max(step / self.num_steps, 0.0), 1.0)
        return (1.0 - a) * self.initial_value + a * self.final_value


class PiecewiseSchedule:
    def __init__(self, schedules):
        self.schedules = [(int(n), from_spec(s)) for n, s in schedules]

    def get(self, step):
        base = 0
        for i, (n, sched) in enumerate(self.schedules):
            last = i == len(self.schedules) - 1
            if last or step < base + n:
                return sched.get(step - base)
            base += n
        return self.schedules[-1][1].get(step - base)


def from_spec(spec):
    if isinstance(spec, tuple):
        kind = spec[0]
        if kind == 'constant':
            return ConstantSchedule(spec[1])
        if kind == 'linear':
            return LinearSchedule(spec[1], spec[2], spec[3])
        raise ValueError(kind)
    if isinstance(spec, dict):
        if spec['type'] == 'piecewise':
            return PiecewiseSchedule(spec['schedules'])
        if spec['type'] == 'linear':
            return LinearSchedule(spec['initial_value'], spec['final_value'],
                                  spec['num_steps'])
    raise ValueError(spec)


hyper_point_max_deg = 1
hyper_alpha_schedule = {'type': 'piecewise',
                        'schedules': [(1000, ('constant', 0.0)),
                                      (0, ('linear', 0.0, hyper_point_max_deg, 10000))]}
hyper_slice_max_deg = 6
slice_alpha_schedule = ('constant', hyper_slice_max_deg)
warp_max_deg = 4
warp_min_deg = 0
warp_alpha_schedule = {'type': 'linear', 'initial_value': warp_min_deg,
                       'final_value': warp_max_deg, 'num_steps': 50000}


def _round_up(x, m):
    return ((x + m - 1) // m) * m


# ---------------------------------------------------------------------------
# Pallas kernel (lane-dense: N on the 128-lane axis)
# ---------------------------------------------------------------------------
def _pe_kernel(xT_ref, w_ref, bias_ref, win_ref, out_ref, *, d_id):
    # xT_ref  : (D, tile)        lane-dense transposed coordinates
    # w_ref   : (R, D)           per-row scale of each coordinate dim (R = 2*F*D)
    # bias_ref: (R, 1)           +pi/2 on cos rows (cos(x) = sin(x + pi/2))
    # win_ref : (R, 1)           scheduler window per frequency row
    # out_ref : (out_dim, tile)  out_dim = d_id + R
    xT = xT_ref[...]
    # arg[r, :] = bias[r] + sum_d W[r, d] * x_d[:]   (bias folded into the init;
    # D broadcast FMAs on the VPU — no MXU matmul).
    arg = bias_ref[...] + w_ref[:, 0:1] * xT[0:1, :]
    for d in range(1, xT.shape[0]):
        arg = arg + w_ref[:, d:d + 1] * xT[d:d + 1, :]
    res = win_ref[...] * jnp.sin(arg)                      # (R, tile)
    if d_id:
        # Identity pass-through rows (include_input): direct static-slice copy.
        out_ref[:d_id, :] = xT.astype(out_ref.dtype)
        out_ref[d_id:, :] = res.astype(out_ref.dtype)
    else:
        out_ref[...] = res.astype(out_ref.dtype)


def _pe_forward(coords, W, bias, win, *, tile_n, d_id, out_dim, out_dtype,
                transposed_output):
    N, D = coords.shape
    R = out_dim - d_id
    xT = coords.T                                          # (D, N): cheap, ~1/9 of output bytes
    # Large tiles amortize the ~0.35us per-grid-step overhead, but keep >= 2
    # grid steps when possible so ("parallel",) can shard across v7x's 2 TCs.
    tile = min(_round_up(tile_n, 128), _round_up(pl.cdiv(N, 2), 128))
    grid = (pl.cdiv(N, tile),)                             # ragged last block handled by Pallas
    kernel = partial(_pe_kernel, d_id=d_id)
    out_t = pl.pallas_call(
        kernel,
        out_shape=jax.ShapeDtypeStruct((out_dim, N), out_dtype),
        grid_spec=pltpu.PrefetchScalarGridSpec(
            num_scalar_prefetch=0,
            grid=grid,
            in_specs=[
                pl.BlockSpec((D, tile), lambda i: (0, i)),     # coords^T, lane-dense
                pl.BlockSpec((R, D), lambda i: (0, 0)),        # per-row scales (resident)
                pl.BlockSpec((R, 1), lambda i: (0, 0)),        # phase bias (resident)
                pl.BlockSpec((R, 1), lambda i: (0, 0)),        # scheduler window (resident)
            ],
            out_specs=pl.BlockSpec((out_dim, tile), lambda i: (0, i)),
        ),
        compiler_params=pltpu.CompilerParams(
            dimension_semantics=("parallel",)),
    )(xT, W, bias, win)
    if transposed_output:
        return out_t                                       # [out_dim, N] fast path
    return out_t.T                                         # reference [N, out_dim] layout


# ---------------------------------------------------------------------------
# Module wrapper (mirrors the PyTorch forward semantics)
# ---------------------------------------------------------------------------
class ScheduledPositionalEmbedder:
    def __init__(self, num_freq, max_freq_log2, log_sampling=True,
                 include_input=False, input_dim=3, scheduler=None,
                 tile_n=16384, out_dtype=jnp.float32, transposed_output=False):
        self.num_freq = int(num_freq)
        self.max_freq_log2 = max_freq_log2
        self.log_sampling = log_sampling
        self.include_input = bool(include_input)
        self.input_dim = int(input_dim)
        self.tile_n = int(tile_n)
        self.out_dtype = out_dtype
        self.transposed_output = bool(transposed_output)

        if log_sampling:
            self.bands = 2.0 ** np.linspace(0.0, max_freq_log2, num_freq,
                                            dtype=np.float32)
        else:
            self.bands = np.linspace(1.0, 2.0 ** max_freq_log2, num_freq,
                                     dtype=np.float32)
        self.d_id = self.input_dim if self.include_input else 0
        self.out_dim = self.d_id + self.num_freq * self.input_dim * 2

        self.scheduler_type = scheduler
        self.scheduler = None
        if scheduler is None:
            pass
        elif scheduler == 'template':
            self.scheduler = from_spec(hyper_alpha_schedule)
        elif scheduler == 'slice':
            self.scheduler = from_spec(slice_alpha_schedule)
        elif scheduler == 'deform':
            self.scheduler = from_spec(warp_alpha_schedule)
        else:
            self.scheduler_type = None

        self._build_static_tables()
        self._win_cache = {}
        self._forward = jax.jit(partial(
            _pe_forward, tile_n=self.tile_n, d_id=self.d_id,
            out_dim=self.out_dim, out_dtype=self.out_dtype,
            transposed_output=self.transposed_output))

    # ---- step -> window over frequencies, numpy [num_freq] ----------------
    def get_screen(self, step):
        if self.scheduler_type is None:
            return np.ones((self.num_freq,), np.float32)
        alpha = self.scheduler.get(step)
        w = np.linspace(0.0, self.num_freq - 1, self.num_freq, dtype=np.float32)
        w = np.clip(alpha - w, 0.0, 1.0)
        return ((1.0 - np.cos(math.pi * w)) / 2.0).astype(np.float32)

    # ---- step-independent device tables (built once) ----------------------
    def _build_static_tables(self):
        D, F = self.input_dim, self.num_freq
        R = 2 * F * D                                 # frequency rows (sin|cos per band)
        W = np.zeros((R, D), np.float32)              # per-row coordinate scale
        bias = np.zeros((R, 1), np.float32)           # +pi/2 on cos rows
        P = np.zeros((F, R), np.float32)              # window placement (host-side)
        half_pi = np.float32(math.pi / 2.0)
        for f in range(F):
            base = f * 2 * D
            for d in range(D):
                W[base + d, d] = self.bands[f]            # sin(b_f * x_d) row
                P[f, base + d] = 1.0
                W[base + D + d, d] = self.bands[f]        # cos(b_f * x_d) row
                bias[base + D + d, 0] = half_pi           # cos(x) = sin(x + pi/2)
                P[f, base + D + d] = 1.0
        self._W = jnp.asarray(W)
        self._bias = jnp.asarray(bias)
        self._P = P                                       # stays on host

    # ---- per-step window column, cached per distinct window ---------------
    def _window_row(self, step):
        window = self.get_screen(step)                    # numpy (F,)
        key = tuple(np.asarray(window, np.float64).tolist())
        col = self._win_cache.get(key)
        if col is None:
            col = jnp.asarray(
                (window[None, :] @ self._P).reshape(-1, 1).astype(np.float32))
            self._win_cache[key] = col
        return col

    def __call__(self, coords, step):
        coords = jnp.asarray(coords, jnp.float32)
        win = self._window_row(step)
        return self._forward(coords, self._W, self._bias, win)


# ---------------------------------------------------------------------------
# Pure-JAX reference (mirrors the PyTorch forward exactly)
# ---------------------------------------------------------------------------
def reference_forward(coords, bands, window, include_input):
    N = coords.shape[0]
    winded = coords[:, None, :] * bands[None, :, None]                   # [N,F,D]
    enc = jnp.concatenate([jnp.sin(winded), jnp.cos(winded)], axis=-1)   # [N,F,2D]
    enc = enc * window[None, :, None]
    enc = enc.reshape(N, -1)
    if include_input:
        enc = jnp.concatenate([coords, enc], axis=-1)
    return enc


if __name__ == "__main__":
    key = jax.random.PRNGKey(0)
    k1, k2, k3 = jax.random.split(key, 3)
    D = 3

    # Case 1: include_input + 'deform' scheduler, default [N, out_dim] layout.
    N = 200
    coords = jax.random.uniform(k1, (N, D), jnp.float32, minval=-1.0, maxval=1.0)
    emb = ScheduledPositionalEmbedder(num_freq=4, max_freq_log2=3,
                                      log_sampling=True, include_input=True,
                                      input_dim=D, scheduler='deform')
    step = 25000               # linear schedule -> alpha = 2.0 -> window = [1, 1, 0, 0]
    out = jax.block_until_ready(emb(coords, step))
    ref = reference_forward(coords, jnp.asarray(emb.bands),
                            jnp.asarray(emb.get_screen(step)), include_input=True)
    assert out.shape == (N, emb.out_dim), (out.shape, emb.out_dim)
    np.testing.assert_allclose(np.asarray(out), np.asarray(ref),
                               rtol=1e-4, atol=1e-4)

    # Case 2: no scheduler, no include_input, ragged N over a 2-step grid
    # (exercises the Pallas partial-last-block path; no wrapper pad/slice).
    N2 = 173
    coords2 = jax.random.uniform(k2, (N2, D), jnp.float32, minval=-1.0, maxval=1.0)
    emb2 = ScheduledPositionalEmbedder(num_freq=4, max_freq_log2=3,
                                       include_input=False, input_dim=D,
                                       scheduler=None)
    out2 = jax.block_until_ready(emb2(coords2, 0))
    ref2 = reference_forward(coords2, jnp.asarray(emb2.bands),
                             jnp.asarray(emb2.get_screen(0)), include_input=False)
    assert out2.shape == (N2, emb2.out_dim), (out2.shape, emb2.out_dim)
    np.testing.assert_allclose(np.asarray(out2), np.asarray(ref2),
                               rtol=1e-4, atol=1e-4)

    # Case 3: lane-dense fast path ([out_dim, N], no transpose pass), higher
    # max_freq_log2 (larger sin arguments) + 'slice' scheduler.
    N3 = 300
    coords3 = jax.random.uniform(k3, (N3, D), jnp.float32, minval=-1.0, maxval=1.0)
    emb3 = ScheduledPositionalEmbedder(num_freq=7, max_freq_log2=6,
                                       include_input=True, input_dim=D,
                                       scheduler='slice', transposed_output=True)
    out3 = jax.block_until_ready(emb3(coords3, 0))
    ref3 = reference_forward(coords3, jnp.asarray(emb3.bands),
                             jnp.asarray(emb3.get_screen(0)), include_input=True)
    assert out3.shape == (emb3.out_dim, N3), (out3.shape, emb3.out_dim)
    np.testing.assert_allclose(np.asarray(out3), np.asarray(ref3).T,
                               rtol=1e-3, atol=1e-3)

    # Case 4: bf16 output hook (halves HBM write traffic); tolerance relaxed to
    # bf16 rounding (~4e-3 abs on values in [-1, 1]).
    emb4 = ScheduledPositionalEmbedder(num_freq=4, max_freq_log2=3,
                                       include_input=True, input_dim=D,
                                       scheduler='deform',
                                       out_dtype=jnp.bfloat16)
    out4 = jax.block_until_ready(emb4(coords, step))
    assert out4.dtype == jnp.bfloat16 and out4.shape == (N, emb4.out_dim)
    np.testing.assert_allclose(np.asarray(out4.astype(jnp.float32)),
                               np.asarray(ref), rtol=0.0, atol=2e-2)

    print("KERNEL_OK")
</pallas_src>

<mosaic_0001>
module attributes {stable_mosaic.version = 11 : i64} {
  func.func @_pe_kernel(%arg0: i32, %arg1: memref<3x128xf32, #tpu.memory_space<vmem>>, %arg2: memref<24x3xf32, #tpu.memory_space<vmem>>, %arg3: memref<24x1xf32, #tpu.memory_space<vmem>>, %arg4: memref<24x1xf32, #tpu.memory_space<vmem>>, %arg5: memref<27x128xf32, #tpu.memory_space<vmem>>) attributes {dimension_semantics = [#tpu.dimension_semantics<parallel>], iteration_bounds = array<i64: 2>, scalar_prefetch = 0 : i64, scratch_operands = 0 : i64, tpu.core_type = #tpu.core_type<tc>, window_params = [{transform_indices = @transform_0, window_bounds = array<i64: 3, 128>}, {pipeline_mode = #tpu.pipeline_mode<synchronous>, transform_indices = @transform_1, window_bounds = array<i64: 24, 3>}, {pipeline_mode = #tpu.pipeline_mode<synchronous>, transform_indices = @transform_2, window_bounds = array<i64: 24, 1>}, {pipeline_mode = #tpu.pipeline_mode<synchronous>, transform_indices = @transform_3, window_bounds = array<i64: 24, 1>}, {transform_indices = @transform_4, window_bounds = array<i64: 27, 128>}]} {
    %c0 = arith.constant 0 : index
    %c0_0 = arith.constant 0 : index
    %0 = vector.load %arg1[%c0, %c0_0] : memref<3x128xf32, #tpu.memory_space<vmem>>, vector<3x128xf32>
    %c0_1 = arith.constant 0 : index
    %c0_2 = arith.constant 0 : index
    %1 = vector.load %arg3[%c0_1, %c0_2] : memref<24x1xf32, #tpu.memory_space<vmem>>, vector<24x1xf32>
    %c0_3 = arith.constant 0 : index
    %c0_4 = arith.constant 0 : index
    %2 = vector.load %arg2[%c0_3, %c0_4] : memref<24x3xf32, #tpu.memory_space<vmem>>, vector<24x1xf32>
    %3 = vector.extract_strided_slice %0 {offsets = [0, 0], sizes = [1, 128], strides = [1, 1]} : vector<3x128xf32> to vector<1x128xf32>
    %4 = vector.broadcast %2 : vector<24x1xf32> to vector<24x128xf32>
    %5 = vector.broadcast %3 : vector<1x128xf32> to vector<24x128xf32>
    %6 = arith.mulf %4, %5 : vector<24x128xf32>
    %7 = vector.broadcast %1 : vector<24x1xf32> to vector<24x128xf32>
    %8 = arith.addf %7, %6 : vector<24x128xf32>
    %c0_5 = arith.constant 0 : index
    %c1 = arith.constant 1 : index
    %9 = vector.load %arg2[%c0_5, %c1] : memref<24x3xf32, #tpu.memory_space<vmem>>, vector<24x1xf32>
    %10 = vector.extract_strided_slice %0 {offsets = [1, 0], sizes = [1, 128], strides = [1, 1]} : vector<3x128xf32> to vector<1x128xf32>
    %11 = vector.broadcast %9 : vector<24x1xf32> to vector<24x128xf32>
    %12 = vector.broadcast %10 : vector<1x128xf32> to vector<24x128xf32>
    %13 = arith.mulf %11, %12 : vector<24x128xf32>
    %14 = arith.addf %8, %13 : vector<24x128xf32>
    %c0_6 = arith.constant 0 : index
    %c2 = arith.constant 2 : index
    %15 = vector.load %arg2[%c0_6, %c2] : memref<24x3xf32, #tpu.memory_space<vmem>>, vector<24x1xf32>
    %16 = vector.extract_strided_slice %0 {offsets = [2, 0], sizes = [1, 128], strides = [1, 1]} : vector<3x128xf32> to vector<1x128xf32>
    %17 = vector.broadcast %15 : vector<24x1xf32> to vector<24x128xf32>
    %18 = vector.broadcast %16 : vector<1x128xf32> to vector<24x128xf32>
    %19 = arith.mulf %17, %18 : vector<24x128xf32>
    %20 = arith.addf %14, %19 : vector<24x128xf32>
    %c0_7 = arith.constant 0 : index
    %c0_8 = arith.constant 0 : index
    %21 = vector.load %arg4[%c0_7, %c0_8] : memref<24x1xf32, #tpu.memory_space<vmem>>, vector<24x1xf32>
    %22 = math.sin %20 : vector<24x128xf32>
    %23 = vector.broadcast %21 : vector<24x1xf32> to vector<24x128xf32>
    %24 = arith.mulf %23, %22 : vector<24x128xf32>
    %c0_9 = arith.constant 0 : index
    %c0_10 = arith.constant 0 : index
    %25 = vector.load %arg5[%c0_9, %c0_10] : memref<27x128xf32, #tpu.memory_space<vmem>>, vector<3x128xf32>
    tpu.vector_store %arg5[%c0_9, %c0_10], %0 {strides = array<i32>} : memref<27x128xf32, #tpu.memory_space<vmem>>, vector<3x128xf32>,
    %c3 = arith.constant 3 : index
    %c0_11 = arith.constant 0 : index
    %26 = vector.load %arg5[%c3, %c0_11] : memref<27x128xf32, #tpu.memory_space<vmem>>, vector<24x128xf32>
    tpu.vector_store %arg5[%c3, %c0_11], %24 {strides = array<i32>} : memref<27x128xf32, #tpu.memory_space<vmem>>, vector<24x128xf32>,
    return
  }
  func.func @transform_0(%arg0: i32) -> (i32, i32) {
    %c0_i32 = arith.constant 0 : i32
    %c0_i32_0 = arith.constant 0 : i32
    return %c0_i32, %arg0 : i32, i32
  }
  func.func @transform_1(%arg0: i32) -> (i32, i32) {
    %c0_i32 = arith.constant 0 : i32
    %c0_i32_0 = arith.constant 0 : i32
    %c0_i32_1 = arith.constant 0 : i32
    return %c0_i32, %c0_i32_0 : i32, i32
  }
  func.func @transform_2(%arg0: i32) -> (i32, i32) {
    %c0_i32 = arith.constant 0 : i32
    %c0_i32_0 = arith.constant 0 : i32
    %c0_i32_1 = arith.constant 0 : i32
    return %c0_i32, %c0_i32_0 : i32, i32
  }
  func.func @transform_3(%arg0: i32) -> (i32, i32) {
    %c0_i32 = arith.constant 0 : i32
    %c0_i32_0 = arith.constant 0 : i32
    %c0_i32_1 = arith.constant 0 : i32
    return %c0_i32, %c0_i32_0 : i32, i32
  }
  func.func @transform_4(%arg0: i32) -> (i32, i32) {
    %c0_i32 = arith.constant 0 : i32
    %c0_i32_0 = arith.constant 0 : i32
    return %c0_i32, %arg0 : i32, i32
  }
}

</mosaic_0001>

<llo_original>
// kernel: _pe_forward.1
$region0: #{_pe_forward.1}
  #allocation0 [shape = 'u32[]', space=smem, size = 0x4, offset = 0x4, fixed_abs, tag = 'smem constant byte address 0x4 - core index']
  #allocation1 [shape = 'u32[144,128]{1,0:T(1,128)}', space=vmem, size = 0x12000, scoped, tag = 'internal scratch']
  %s0 = inlined_call_operand.vmem [shape: f32[3,200], index: 0, kind: input, shape index: {}]
  %s1 = inlined_call_operand.vmem [shape: f32[24,3], index: 1, kind: input, shape index: {}]
  %s2 = inlined_call_operand.vmem [shape: f32[24,1], index: 2, kind: input, shape index: {}]
  %s3 = inlined_call_operand.vmem [shape: f32[24,1], index: 3, kind: input, shape index: {}]
  %s4 = inlined_call_operand.hbm [shape: f32[27,200], index: 4, kind: output, shape index: {}]
  %s5 = sld [smem:[#allocation0]]
  $region49: #{_pe_forward.1} parent=0
    _
  %s7 = ssub.s32 1, %s5
  %s8 = scalar_select 0, %s7, %s5
  $region1: #{_pe_forward.1} parent=0
    #allocation2 [shape = 'u8[32768]{0}', space=vmem, size = 0x8000, scoped, tag = 'output window, operand 0']
    #allocation3 [shape = 's32[2]{0}', space=sflag, size = 0x8, scoped, tag = 'scoped memory for _pe_forward.1']
    %9 = vsyncpa [#allocation3], 0
    %s10 = scalar_lea.sflag [#allocation3], 1
    %11 = vsyncpa %s10, 0
    loop: start=0, step=1, limit=4
    $region2: #{_pe_forward.1} parent=1 // loop_pre_header
      _
    $region3: #{_pe_forward.1} parent=1 // loop_header
      %s13 = sphi 0, %s17
      %p14 = scmp.ge.s32.totalorder %s13, 4
      %s23 = sphi 0, %s25
      %s26 = sphi 0, %s23
      %s27 = sphi 0, %s26
      %s43 = sphi 0, %s27
      %s47 = sphi 0, %s47
      %s49 = sphi 0, %s47
      %s50 = sphi 0, %s49
      %s64 = sphi 0, %s50
      %s68 = sphi 0, %s68
      %s70 = sphi 0, %s68
      %s71 = sphi 0, %s70
      %s85 = sphi 0, %s71
      %s89 = sphi 0, %s89
      %s91 = sphi 0, %s89
      %s92 = sphi 0, %s91
      %s106 = sphi 0, %s92
      %s112 = sphi 0, %s114
      %s115 = sphi 0, %s112
      %s116 = sphi 0, %s115
      %s132 = sphi 0, %s116
    $region4: #{_pe_forward.1} parent=1 // loop_header_branch
      %16 = sbr.rel (%p14) target = $region8
    $region5: #{_pe_forward.1} parent=1 // loop_body
      %s18 = ssub.s32 %s13, 1
      %s19 = ssub.s32 %s13, 2
      %s20 = sadd.s32 %s13, 1
      %s21 = ssub.s32 %s13, %s20
      %p22 = scmp.eq.s32.totalorder %s21, 0
      %s24 = sadd.s32 %s23, 1
      %s25 = scalar_select %p22, %s23, %s24
      %p28 = pneg %p22
      %p29 = scmp.eq.s32.totalorder %s13, 1
      %p30 = por %p28, %p29
      %p31 = scmp.ne.s32.totalorder %s23, %s26
      %p32 = scmp.eq.s32.totalorder %s13, 0
      %p33 = por %p31, %p32
      %p34 = scmp.ne.s32.totalorder %s23, %s26
      %p35 = scmp.eq.s32.totalorder %s18, 1
      %p36 = por %p34, %p35
      %p37 = scmp.ne.s32.totalorder %s26, %s27
      %p38 = scmp.eq.s32.totalorder %s18, 0
      %p39 = por %p37, %p38
      %p40 = scmp.ne.s32.totalorder %s26, %s27
      %p41 = scmp.eq.s32.totalorder %s19, 1
      %p42 = por %p40, %p41
      %p44 = scmp.ne.s32.totalorder %s27, %s43
      %p45 = scmp.eq.s32.totalorder %s19, 0
      %p46 = por %p44, %p45
      %s48 = sadd.s32 %s47, 1
      %p51 = scmp.eq.s32.totalorder %s13, 1
      %p52 = scmp.ne.s32.totalorder %s47, %s49
      %p53 = scmp.eq.s32.totalorder %s13, 0
      %p54 = por %p52, %p53
      %p55 = scmp.ne.s32.totalorder %s47, %s49
      %p56 = scmp.eq.s32.totalorder %s18, 1
      %p57 = por %p55, %p56
      %p58 = scmp.ne.s32.totalorder %s49, %s50
      %p59 = scmp.eq.s32.totalorder %s18, 0
      %p60 = por %p58, %p59
      %p61 = scmp.ne.s32.totalorder %s49, %s50
      %p62 = scmp.eq.s32.totalorder %s19, 1
      %p63 = por %p61, %p62
      %p65 = scmp.ne.s32.totalorder %s50, %s64
      %p66 = scmp.eq.s32.totalorder %s19, 0
      %p67 = por %p65, %p66
      %s69 = sadd.s32 %s68, 1
      %p72 = scmp.eq.s32.totalorder %s13, 1
      %p73 = scmp.ne.s32.totalorder %s68, %s70
      %p74 = scmp.eq.s32.totalorder %s13, 0
      %p75 = por %p73, %p74
      %p76 = scmp.ne.s32.totalorder %s68, %s70
      %p77 = scmp.eq.s32.totalorder %s18, 1
      %p78 = por %p76, %p77
      %p79 = scmp.ne.s32.totalorder %s70, %s71
      %p80 = scmp.eq.s32.totalorder %s18, 0
      %p81 = por %p79, %p80
      %p82 = scmp.ne.s32.totalorder %s70, %s71
      %p83 = scmp.eq.s32.totalorder %s19, 1
      %p84 = por %p82, %p83
      %p86 = scmp.ne.s32.totalorder %s71, %s85
      %p87 = scmp.eq.s32.totalorder %s19, 0
      %p88 = por %p86, %p87
      %s90 = sadd.s32 %s89, 1
      %p93 = scmp.eq.s32.totalorder %s13, 1
      %p94 = scmp.ne.s32.totalorder %s89, %s91
      %p95 = scmp.eq.s32.totalorder %s13, 0
      %p96 = por %p94, %p95
      %p97 = scmp.ne.s32.totalorder %s89, %s91
      %p98 = scmp.eq.s32.totalorder %s18, 1
      %p99 = por %p97, %p98
      %p100 = scmp.ne.s32.totalorder %s91, %s92
      %p101 = scmp.eq.s32.totalorder %s18, 0
      %p102 = por %p100, %p101
      %p103 = scmp.ne.s32.totalorder %s91, %s92
      %p104 = scmp.eq.s32.totalorder %s19, 1
      %p105 = por %p103, %p104
      %p107 = scmp.ne.s32.totalorder %s92, %s106
      %p108 = scmp.eq.s32.totalorder %s19, 0
      %p109 = por %p107, %p108
      %s110 = ssub.s32 %s13, %s20
      %p111 = scmp.eq.s32.totalorder %s110, 0
      %s113 = sadd.s32 %s112, 1
      %s114 = scalar_select %p111, %s112, %s113
      %p117 = pneg %p111
      %p118 = scmp.eq.s32.totalorder %s13, 1
      %p119 = por %p117, %p118
      %p120 = scmp.ne.s32.totalorder %s112, %s115
      %p121 = scmp.eq.s32.totalorder %s13, 0
      %p122 = por %p120, %p121
      %p123 = scmp.ne.s32.totalorder %s112, %s115
      %p124 = scmp.eq.s32.totalorder %s18, 1
      %p125 = por %p123, %p124
      %p126 = scmp.ne.s32.totalorder %s115, %s116
      %p127 = scmp.eq.s32.totalorder %s18, 0
      %p128 = por %p126, %p127
      %p129 = scmp.ne.s32.totalorder %s115, %s116
      %p130 = scmp.eq.s32.totalorder %s19, 1
      %p131 = por %p129, %p130
      %p133 = scmp.ne.s32.totalorder %s116, %s132
      %p134 = scmp.eq.s32.totalorder %s19, 0
      %p135 = por %p133, %p134
      %p136 = scmp.le.s32.totalorder 1, %s13
      %p137 = scmp.lt.s32.totalorder %s13, 3
      %p138 = pnand %p136, %p137
      %p139 = pneg %p138
      // Predicated region
      $region9: #{_pe_forward.1} parent=5 // pred_check
        _
      $region10: #{_pe_forward.1} parent=5 // pred_check_branch
        %141 = sbr.rel (%p138) target = $region12
      $region11: #{_pe_forward.1} parent=5 // pred_region
        %s142 = ssub.s32 %s13, 1
        // Predicated region
        $region13: #{_pe_forward.1} parent=11 // pred_check
          %p143 = pneg %p60
        $region14: #{_pe_forward.1} parent=11 // pred_check_branch
          %145 = sbr.rel (%p143) target = $region16
        $region15: #{_pe_forward.1} parent=11 // pred_region
          _
        $region16: #{_pe_forward.1} parent=11 // pred_fallthru
          _
        // Predicated region
        $region17: #{_pe_forward.1} parent=11 // pred_check
          %p146 = pneg %p81
        $region18: #{_pe_forward.1} parent=11 // pred_check_branch
          %148 = sbr.rel (%p146) target = $region20
        $region19: #{_pe_forward.1} parent=11 // pred_region
          _
        $region20: #{_pe_forward.1} parent=11 // pred_fallthru
          _
        // Predicated region
        $region21: #{_pe_forward.1} parent=11 // pred_check
          %p149 = pneg %p102
        $region22: #{_pe_forward.1} parent=11 // pred_check_branch
          %151 = sbr.rel (%p149) target = $region24
        $region23: #{_pe_forward.1} parent=11 // pred_region
          _
        $region24: #{_pe_forward.1} parent=11 // pred_fallthru
          _
      $region12: #{_pe_forward.1} parent=5 // pred_fallthru
        _
      %p152 = scmp.lt.s32.totalorder %s13, 2
      // Predicated region
      $region25: #{_pe_forward.1} parent=5 // pred_check
        %p153 = pneg %p152
      $region26: #{_pe_forward.1} parent=5 // pred_check_branch
        %155 = sbr.rel (%p153) target = $region28
      $region27: #{_pe_forward.1} parent=5 // pred_region
        // Predicated region
        $region29: #{_pe_forward.1} parent=27 // pred_check
          %p156 = pneg %p33
        $region30: #{_pe_forward.1} parent=27 // pred_check_branch
          %158 = sbr.rel (%p156) target = $region32
        $region31: #{_pe_forward.1} parent=27 // pred_region
          %p159 = scmp.lt.s32.totalorder %s13, 1
          %s160 = scalar_select %p159, %s13, 1
          %s161 = smul.addr %s160, 4
          %s162 = scalar_lea.vmem %s0, %s161
        $region32: #{_pe_forward.1} parent=27 // pred_fallthru
          _
      $region28: #{_pe_forward.1} parent=5 // pred_fallthru
        _
      %p163 = scmp.le.s32.totalorder 1, %s13
      %p164 = scmp.lt.s32.totalorder %s13, 3
      %p165 = pnand %p163, %p164
      %p166 = pneg %p165
      // Predicated region
      $region33: #{_pe_forward.1} parent=5 // pred_check
        _
      $region34: #{_pe_forward.1} parent=5 // pred_check_branch
        %168 = sbr.rel (%p165) target = $region36
      $region35: #{_pe_forward.1} parent=5 // pred_region
        %s169 = ssub.s32 %s13, 1
        %p170 = scmp.lt.s32.totalorder %s18, 1
        %s171 = scalar_select %p170, %s18, 1
        %s172 = smul.addr %s171, 4
        %s173 = scalar_lea.vmem %s0, %s172
        %p174 = pneg %p39
        %p175 = pneg %p36
        %p176 = pneg %p60
        %p177 = pneg %p57
        %p178 = pneg %p81
        %p179 = pneg %p78
        %p180 = pneg %p102
        %p181 = pneg %p99
        %p182 = pneg %p128
        %p183 = pneg %p125
        %s184 = sand.u32 %s115, 1
        %s185 = scalar_lea.sflag [#allocation3], %s184
        %s186 = sand.u32 %s115, 1
        %s187 = smul.addr %s186, 32
        %s188 = scalar_lea.vmem [#allocation2], %s187
        %p189 = scmp.lt.s32.totalorder %s18, 1
        %s190 = scalar_select %p189, %s18, 1
        %s191 = smul.addr %s190, 4
        %s192 = scalar_lea.vmem %s0, %s191
        %v193 = vld [vmem:[%s192] sm:$0x7]
        %v194 = vld [vmem:[%s2] sm:$0xff]
        %v195 = vld [vmem:[%s2 + $0x8] sm:$0xff]
        %v196 = vld [vmem:[%s2 + $0x10] sm:$0xff]
        %v197 = vld [vmem:[%s1] sm:$0xff]
        %v198 = vld [vmem:[%s1 + $0x8] sm:$0xff]
        %v199 = vld [vmem:[%s1 + $0x10] sm:$0xff]
        %201 = vset.pattern.permute.xlu0 0
        %202 = vperm.xlu0 %201, %v197
        %v203 = vpop.permute.xlu0 %202
        %206 = vset.pattern.permute.xlu0 0
        %207 = vperm.xlu0 %206, %v198
        %v208 = vpop.permute.xlu0 %207
        %211 = vset.pattern.permute.xlu0 0
        %212 = vperm.xlu0 %211, %v199
        %v213 = vpop.permute.xlu0 %212
        %v215 = vlaneseq
        %v216 = vshrl.u32 %v215, 7
        %v217 = vsub.s32 0, %v216
        %v218 = vrot.slane %v193, %v217
        %v219 = vmul.f32 %v203, %v218
        %v220 = vmul.f32 %v208, %v218
        %v221 = vmul.f32 %v213, %v218
        %223 = vset.pattern.permute.xlu0 0
        %224 = vperm.xlu0 %223, %v194
        %v225 = vpop.permute.xlu0 %224
        %228 = vset.pattern.permute.xlu0 0
        %229 = vperm.xlu0 %228, %v195
        %v230 = vpop.permute.xlu0 %229
        %233 = vset.pattern.permute.xlu0 0
        %234 = vperm.xlu0 %233, %v196
        %v235 = vpop.permute.xlu0 %234
        %v237 = vadd.f32 %v225, %v219
        %v238 = vadd.f32 %v230, %v220
        %v239 = vadd.f32 %v235, %v221
        %240 = vset.pattern.permute.xlu0 1
        %241 = vperm.xlu0 %240, %v197
        %v242 = vpop.permute.xlu0 %241
        %244 = vset.pattern.permute.xlu0 1
        %245 = vperm.xlu0 %244, %v198
        %v246 = vpop.permute.xlu0 %245
        %248 = vset.pattern.permute.xlu0 1
        %249 = vperm.xlu0 %248, %v199
        %v250 = vpop.permute.xlu0 %249
        %v252 = vlaneseq
        %v253 = vshrl.u32 %v252, 7
        %v254 = vsub.s32 1, %v253
        %v255 = vrot.slane %v193, %v254
        %v256 = vmul.f32 %v242, %v255
        %v257 = vmul.f32 %v246, %v255
        %v258 = vmul.f32 %v250, %v255
        %v259 = vadd.f32 %v237, %v256
        %v260 = vadd.f32 %v238, %v257
        %v261 = vadd.f32 %v239, %v258
        %262 = vset.pattern.permute.xlu0 2
        %263 = vperm.xlu0 %262, %v197
        %v264 = vpop.permute.xlu0 %263
        %266 = vset.pattern.permute.xlu0 2
        %267 = vperm.xlu0 %266, %v198
        %v268 = vpop.permute.xlu0 %267
        %270 = vset.pattern.permute.xlu0 2
        %271 = vperm.xlu0 %270, %v199
        %v272 = vpop.permute.xlu0 %271
        %v274 = vlaneseq
        %v275 = vshrl.u32 %v274, 7
        %v276 = vsub.s32 2, %v275
        %v277 = vrot.slane %v193, %v276
        %v278 = vmul.f32 %v264, %v277
        %v279 = vmul.f32 %v268, %v277
        %v280 = vmul.f32 %v272, %v277
        %v281 = vadd.f32 %v259, %v278
        %v282 = vadd.f32 %v260, %v279
        %v283 = vadd.f32 %v261, %v280
        %v284 = vld [vmem:[%s3] sm:$0xff]
        %v285 = vld [vmem:[%s3 + $0x8] sm:$0xff]
        %v286 = vld [vmem:[%s3 + $0x10] sm:$0xff]
        %v287 = vand.u32 2147483647, %v281
        %vm288 = vcmp.le.f32.partialorder %v287, 0.7853982
        %vm289 = vcmp.lt.s32.totalorder %v281, 0
        %v290 = vand.u32 %v281, 2139095040
        %v291 = vshrl.u32 %v290, 23
        %v292 = vsub.s32 %v291, 127
        %v293 = vand.u32 2147483647, %v281
        %v294 = vand.u32 %v293, 8388607
        %v295 = vor.u32 %v294, 8388608
        %v296 = vsub.s32 0, %v295
        %v297 = vadd.s32 %v292, 1
        %vm298 = vcmp.gt.s32.totalorder %v297, 0
        %v299 = vsel %vm298, %v297, 0
        %v300 = vshrl.u32 %v299, 5
        %v301 = vand.u32 %v299, 31
        %v302 = vsub.s32 32, %v301
        %v303 = vshrl.u32 683565275, %v302
        %v304 = vshll.u32 683565275, %v301
        %v305 = vshrl.u32 2475754826, %v302
        %v306 = vor.u32 %v304, %v305
        %v307 = vshll.u32 2475754826, %v301
        %v308 = vshrl.u32 2131351028, %v302
        %v309 = vor.u32 %v307, %v308
        %v310 = vshll.u32 2131351028, %v301
        %v311 = vshrl.u32 2102212464, %v302
        %v312 = vor.u32 %v310, %v311
        %v313 = vshll.u32 2102212464, %v301
        %v314 = vshrl.u32 920167782, %v302
        %v315 = vor.u32 %v313, %v314
        %v316 = vshll.u32 920167782, %v301
        %v317 = vshrl.u32 1326507024, %v302
        %v318 = vor.u32 %v316, %v317
        %vm319 = vcmp.lt.s32.totalorder %v300, 1
        %vm320 = vcmp.lt.s32.totalorder %v300, 2
        %vm321 = vcmp.lt.s32.totalorder %v300, 3
        %vm322 = vcmp.lt.s32.totalorder %v300, 4
        %v323 = vsel %vm319, %v303, %v306
        %v324 = vsel %vm322, %v312, 2102212464
        %v325 = vsel %vm321, %v309, %v324
        %v326 = vsel %vm320, %v323, %v325
        %v327 = vsel %vm319, %v306, %v309
        %v328 = vsel %vm322, %v315, 920167782
        %v329 = vsel %vm321, %v312, %v328
        %v330 = vsel %vm320, %v327, %v329
        %v331 = vsel %vm319, %v309, %v312
        %v332 = vsel %vm322, %v318, 1326507024
        %v333 = vsel %vm321, %v315, %v332
        %v334 = vsel %vm320, %v331, %v333
        %v335 = vshll.u32 %v295, 8
        %v336 = vmul.u32.u64.compose %v335, %v334
        %v337 = vextract.low.u32 %v336
        %v338 = vextract.high.u32 %v336
        %v339 = vmul.u32.u64.compose %v335, %v330
        %v340 = vextract.low.u32 %v339
        %v341 = vextract.high.u32 %v339
        %v342 = vmul.u32 %v335, %v326
        %v343 = vadd.s32 %v338, %v340
        %vm344 = vc.u32 %v338, %v340
        %v345 = vadd.s32 %v341, 1
        %v346 = vsel %vm344, %v345, %v341
        %v347 = vadd.s32 %v342, %v346
        %v348 = vadd.s32 %v347, 536870912
        %v349 = vshrl.u32 %v348, 30
        %v350 = vshll.u32 %v349, 30
        %v351 = vsub.s32 %v347, %v350
        %vm352 = vcmp.lt.s32.totalorder %v351, 0
        %v353 = vsub.s32 0, %v351
        %v354 = vsel %vm352, %v353, %v351
        %v355 = vclz %v354
        %v356 = vsub.s32 %v355, 2
        %vm357 = vcmp.gt.s32.totalorder 0, %v356
        %v358 = vsel %vm357, 0, %v356
        %v359 = vsub.s32 32, %v358
        %v360 = vshll.u32 %v351, %v358
        %v361 = vshrl.u32 %v343, %v359
        %v362 = vor.u32 %v360, %v361
        %v363 = vsub.s32 4294967266, %v358
        %v364 = vadd.s32 %v363, 127
        %v365 = vshll.u32 %v364, 23
        %v366 = vor.u32 4788187, %v365
        %v367 = vand.u32 2147483647, %v366
        %v369 = vcvt.s32.f32 %v362
        %v370 = vmul.f32 %v369, %v367
        %v371 = vxor.u32 %v370, 2147483648
        %v372 = vsel %vm289, %v371, %v370
        %v373 = vsub.s32 4, %v349
        %v374 = vsel %vm289, %v373, %v349
        %v375 = vsel %vm288, %v281, %v372
        %v376 = vsel %vm288, 0, %v374
        %v377 = vcosq.f32.pop %v375
        %v378 = vsinq.f32.pop %v375
        %vm379 = vweird.f32 %v281
        %v380 = vadd.s32 %v376, 3
        %v381 = vand.u32 %v380, 3
        %vm382 = vcmp.lt.s32.totalorder %v381, 2
        %vm383 = vcmp.eq.s32.totalorder %v381, 0
        %v384 = vxor.u32 %v378, 2147483648
        %v385 = vsel %vm383, %v377, %v384
        %vm386 = vcmp.eq.s32.totalorder %v381, 2
        %v387 = vxor.u32 %v377, 2147483648
        %v388 = vsel %vm386, %v387, %v378
        %v389 = vsel %vm382, %v385, %v388
        %v390 = vsel %vm379, nan, %v389
        %v391 = vand.u32 2147483647, %v282
        %vm392 = vcmp.le.f32.partialorder %v391, 0.7853982
        %vm393 = vcmp.lt.s32.totalorder %v282, 0
        %v394 = vand.u32 %v282, 2139095040
        %v395 = vshrl.u32 %v394, 23
        %v396 = vsub.s32 %v395, 127
        %v397 = vand.u32 2147483647, %v282
        %v398 = vand.u32 %v397, 8388607
        %v399 = vor.u32 %v398, 8388608
        %v400 = vsub.s32 0, %v399
        %v401 = vadd.s32 %v396, 1
        %vm402 = vcmp.gt.s32.totalorder %v401, 0
        %v403 = vsel %vm402, %v401, 0
        %v404 = vshrl.u32 %v403, 5
        %v405 = vand.u32 %v403, 31
        %v406 = vsub.s32 32, %v405
        %v407 = vshrl.u32 683565275, %v406
        %v408 = vshll.u32 683565275, %v405
        %v409 = vshrl.u32 2475754826, %v406
        %v410 = vor.u32 %v408, %v409
        %v411 = vshll.u32 2475754826, %v405
        %v412 = vshrl.u32 2131351028, %v406
        %v413 = vor.u32 %v411, %v412
        %v414 = vshll.u32 2131351028, %v405
        %v415 = vshrl.u32 2102212464, %v406
        %v416 = vor.u32 %v414, %v415
        %v417 = vshll.u32 2102212464, %v405
        %v418 = vshrl.u32 920167782, %v406
        %v419 = vor.u32 %v417, %v418
        %v420 = vshll.u32 920167782, %v405
        %v421 = vshrl.u32 1326507024, %v406
        %v422 = vor.u32 %v420, %v421
        %vm423 = vcmp.lt.s32.totalorder %v404, 1
        %vm424 = vcmp.lt.s32.totalorder %v404, 2
        %vm425 = vcmp.lt.s32.totalorder %v404, 3
        %vm426 = vcmp.lt.s32.totalorder %v404, 4
        %v427 = vsel %vm423, %v407, %v410
        %v428 = vsel %vm426, %v416, 2102212464
        %v429 = vsel %vm425, %v413, %v428
        %v430 = vsel %vm424, %v427, %v429
        %v431 = vsel %vm423, %v410, %v413
        %v432 = vsel %vm426, %v419, 920167782
        %v433 = vsel %vm425, %v416, %v432
        %v434 = vsel %vm424, %v431, %v433
        %v435 = vsel %vm423, %v413, %v416
        %v436 = vsel %vm426, %v422, 1326507024
        %v437 = vsel %vm425, %v419, %v436
        %v438 = vsel %vm424, %v435, %v437
        %v439 = vshll.u32 %v399, 8
        %v440 = vmul.u32.u64.compose %v439, %v438
        %v441 = vextract.low.u32 %v440
        %v442 = vextract.high.u32 %v440
        %v443 = vmul.u32.u64.compose %v439, %v434
        %v444 = vextract.low.u32 %v443
        %v445 = vextract.high.u32 %v443
        %v446 = vmul.u32 %v439, %v430
        %v447 = vadd.s32 %v442, %v444
        %vm448 = vc.u32 %v442, %v444
        %v449 = vadd.s32 %v445, 1
        %v450 = vsel %vm448, %v449, %v445
        %v451 = vadd.s32 %v446, %v450
        %v452 = vadd.s32 %v451, 536870912
        %v453 = vshrl.u32 %v452, 30
        %v454 = vshll.u32 %v453, 30
        %v455 = vsub.s32 %v451, %v454
        %vm456 = vcmp.lt.s32.totalorder %v455, 0
        %v457 = vsub.s32 0, %v455
        %v458 = vsel %vm456, %v457, %v455
        %v459 = vclz %v458
        %v460 = vsub.s32 %v459, 2
        %vm461 = vcmp.gt.s32.totalorder 0, %v460
        %v462 = vsel %vm461, 0, %v460
        %v463 = vsub.s32 32, %v462
        %v464 = vshll.u32 %v455, %v462
        %v465 = vshrl.u32 %v447, %v463
        %v466 = vor.u32 %v464, %v465
        %v467 = vsub.s32 4294967266, %v462
        %v468 = vadd.s32 %v467, 127
        %v469 = vshll.u32 %v468, 23
        %v470 = vor.u32 4788187, %v469
        %v471 = vand.u32 2147483647, %v470
        %v473 = vcvt.s32.f32 %v466
        %v474 = vmul.f32 %v473, %v471
        %v475 = vxor.u32 %v474, 2147483648
        %v476 = vsel %vm393, %v475, %v474
        %v477 = vsub.s32 4, %v453
        %v478 = vsel %vm393, %v477, %v453
        %v479 = vsel %vm392, %v282, %v476
        %v480 = vsel %vm392, 0, %v478
        %v481 = vcosq.f32.pop %v479
        %v482 = vsinq.f32.pop %v479
        %vm483 = vweird.f32 %v282
        %v484 = vadd.s32 %v480, 3
        %v485 = vand.u32 %v484, 3
        %vm486 = vcmp.lt.s32.totalorder %v485, 2
        %vm487 = vcmp.eq.s32.totalorder %v485, 0
        %v488 = vxor.u32 %v482, 2147483648
        %v489 = vsel %vm487, %v481, %v488
        %vm490 = vcmp.eq.s32.totalorder %v485, 2
        %v491 = vxor.u32 %v481, 2147483648
        %v492 = vsel %vm490, %v491, %v482
        %v493 = vsel %vm486, %v489, %v492
        %v494 = vsel %vm483, nan, %v493
        %v495 = vand.u32 2147483647, %v283
        %vm496 = vcmp.le.f32.partialorder %v495, 0.7853982
        %vm497 = vcmp.lt.s32.totalorder %v283, 0
        %v498 = vand.u32 %v283, 2139095040
        %v499 = vshrl.u32 %v498, 23
        %v500 = vsub.s32 %v499, 127
        %v501 = vand.u32 2147483647, %v283
        %v502 = vand.u32 %v501, 8388607
        %v503 = vor.u32 %v502, 8388608
        %v504 = vsub.s32 0, %v503
        %v505 = vadd.s32 %v500, 1
        %vm506 = vcmp.gt.s32.totalorder %v505, 0
        %v507 = vsel %vm506, %v505, 0
        %v508 = vshrl.u32 %v507, 5
        %v509 = vand.u32 %v507, 31
        %v510 = vsub.s32 32, %v509
        %v511 = vshrl.u32 683565275, %v510
        %v512 = vshll.u32 683565275, %v509
        %v513 = vshrl.u32 2475754826, %v510
        %v514 = vor.u32 %v512, %v513
        %v515 = vshll.u32 2475754826, %v509
        %v516 = vshrl.u32 2131351028, %v510
        %v517 = vor.u32 %v515, %v516
        %v518 = vshll.u32 2131351028, %v509
        %v519 = vshrl.u32 2102212464, %v510
        %v520 = vor.u32 %v518, %v519
        %v521 = vshll.u32 2102212464, %v509
        %v522 = vshrl.u32 920167782, %v510
        %v523 = vor.u32 %v521, %v522
        %v524 = vshll.u32 920167782, %v509
        %v525 = vshrl.u32 1326507024, %v510
        %v526 = vor.u32 %v524, %v525
        %vm527 = vcmp.lt.s32.totalorder %v508, 1
        %vm528 = vcmp.lt.s32.totalorder %v508, 2
        %vm529 = vcmp.lt.s32.totalorder %v508, 3
        %vm530 = vcmp.lt.s32.totalorder %v508, 4
        %v531 = vsel %vm527, %v511, %v514
        %v532 = vsel %vm530, %v520, 2102212464
        %v533 = vsel %vm529, %v517, %v532
        %v534 = vsel %vm528, %v531, %v533
        %v535 = vsel %vm527, %v514, %v517
        %v536 = vsel %vm530, %v523, 920167782
        %v537 = vsel %vm529, %v520, %v536
        %v538 = vsel %vm528, %v535, %v537
        %v539 = vsel %vm527, %v517, %v520
        %v540 = vsel %vm530, %v526, 1326507024
        %v541 = vsel %vm529, %v523, %v540
        %v542 = vsel %vm528, %v539, %v541
        %v543 = vshll.u32 %v503, 8
        %v544 = vmul.u32.u64.compose %v543, %v542
        %v545 = vextract.low.u32 %v544
        %v546 = vextract.high.u32 %v544
        %v547 = vmul.u32.u64.compose %v543, %v538
        %v548 = vextract.low.u32 %v547
        %v549 = vextract.high.u32 %v547
        %v550 = vmul.u32 %v543, %v534
        %v551 = vadd.s32 %v546, %v548
        %vm552 = vc.u32 %v546, %v548
        %v553 = vadd.s32 %v549, 1
        %v554 = vsel %vm552, %v553, %v549
        %v555 = vadd.s32 %v550, %v554
        %v556 = vadd.s32 %v555, 536870912
        %v557 = vshrl.u32 %v556, 30
        %v558 = vshll.u32 %v557, 30
        %v559 = vsub.s32 %v555, %v558
        %vm560 = vcmp.lt.s32.totalorder %v559, 0
        %v561 = vsub.s32 0, %v559
        %v562 = vsel %vm560, %v561, %v559
        %v563 = vclz %v562
        %v564 = vsub.s32 %v563, 2
        %vm565 = vcmp.gt.s32.totalorder 0, %v564
        %v566 = vsel %vm565, 0, %v564
        %v567 = vsub.s32 32, %v566
        %v568 = vshll.u32 %v559, %v566
        %v569 = vshrl.u32 %v551, %v567
        %v570 = vor.u32 %v568, %v569
        %v571 = vsub.s32 4294967266, %v566
        %v572 = vadd.s32 %v571, 127
        %v573 = vshll.u32 %v572, 23
        %v574 = vor.u32 4788187, %v573
        %v575 = vand.u32 2147483647, %v574
        %v577 = vcvt.s32.f32 %v570
        %v578 = vmul.f32 %v577, %v575
        %v579 = vxor.u32 %v578, 2147483648
        %v580 = vsel %vm497, %v579, %v578
        %v581 = vsub.s32 4, %v557
        %v582 = vsel %vm497, %v581, %v557
        %v583 = vsel %vm496, %v283, %v580
        %v584 = vsel %vm496, 0, %v582
        %v585 = vcosq.f32.pop %v583
        %v586 = vsinq.f32.pop %v583
        %vm587 = vweird.f32 %v283
        %v588 = vadd.s32 %v584, 3
        %v589 = vand.u32 %v588, 3
        %vm590 = vcmp.lt.s32.totalorder %v589, 2
        %vm591 = vcmp.eq.s32.totalorder %v589, 0
        %v592 = vxor.u32 %v586, 2147483648
        %v593 = vsel %vm591, %v585, %v592
        %vm594 = vcmp.eq.s32.totalorder %v589, 2
        %v595 = vxor.u32 %v585, 2147483648
        %v596 = vsel %vm594, %v595, %v586
        %v597 = vsel %vm590, %v593, %v596
        %v598 = vsel %vm587, nan, %v597
        %600 = vset.pattern.permute.xlu0 0
        %601 = vperm.xlu0 %600, %v284
        %v602 = vpop.permute.xlu0 %601
        %605 = vset.pattern.permute.xlu0 0
        %606 = vperm.xlu0 %605, %v285
        %v607 = vpop.permute.xlu0 %606
        %610 = vset.pattern.permute.xlu0 0
        %611 = vperm.xlu0 %610, %v286
        %v612 = vpop.permute.xlu0 %611
        %v614 = vmul.f32 %v602, %v390
        %v615 = vmul.f32 %v607, %v494
        %v616 = vmul.f32 %v612, %v598
        %617 = vst [vmem:[%s188] sm:$0x7] %v193
        %618 = vst [vmem:[%s188 + $0x3] sm:$0xff] %v614
        %619 = vst [vmem:[%s188 + $0xb] sm:$0xff] %v615
        %620 = vst [vmem:[%s188 + $0x13] sm:$0xff] %v616
        %s621 = sand.u32 %s115, 1
        %s622 = scalar_lea.sflag [#allocation3], %s621
        %s623 = sand.u32 %s115, 1
        %s624 = smul.addr %s623, 32
        %s625 = scalar_lea.vmem [#allocation2], %s624
        // Predicated region
        $region37: #{_pe_forward.1} parent=35 // pred_check
          %p626 = pneg %p125
        $region38: #{_pe_forward.1} parent=35 // pred_check_branch
          %628 = sbr.rel (%p626) target = $region40
        $region39: #{_pe_forward.1} parent=35 // pred_region
          %s630 = ssub.s32 512, 512
          %631 = vsyncadd %s622, %s630
          %s632 = smul.addr %s18, 128
          %s633 = scalar_lea.hbm %s4, %s632
          %s634 = sshll.u32 %s625, 4
          %s635 = int_to_ptr.vmem [resolvable:$true] %s634
          %640 = dma.vmem_to_hbm [thread:$0]  %s635, 512, %s633, %s622, 128, 256, 8
        $region40: #{_pe_forward.1} parent=35 // pred_fallthru
          _
      $region36: #{_pe_forward.1} parent=5 // pred_fallthru
        _
      %p641 = scmp.le.s32.totalorder 2, %s13
      // Predicated region
      $region41: #{_pe_forward.1} parent=5 // pred_check
        %p642 = pneg %p641
      $region42: #{_pe_forward.1} parent=5 // pred_check_branch
        %644 = sbr.rel (%p642) target = $region44
      $region43: #{_pe_forward.1} parent=5 // pred_region
        %s645 = ssub.s32 %s13, 2
        // Predicated region
        $region45: #{_pe_forward.1} parent=43 // pred_check
          %p646 = pneg %p131
        $region46: #{_pe_forward.1} parent=43 // pred_check_branch
          %648 = sbr.rel (%p646) target = $region48
        $region47: #{_pe_forward.1} parent=43 // pred_region
          %s649 = sand.u32 %s116, 1
          %s650 = scalar_lea.sflag [#allocation3], %s649
          %s651 = sand.u32 %s116, 1
          %s652 = smul.addr %s651, 32
          %s653 = scalar_lea.vmem [#allocation2], %s652
          %654 = dma.done %s650, 512
        $region48: #{_pe_forward.1} parent=43 // pred_fallthru
          _
      $region44: #{_pe_forward.1} parent=5 // pred_fallthru
        _
    $region6: #{_pe_forward.1} parent=1 // loop_footer
      %s17 = sadd.s32 1, %s13
    $region7: #{_pe_forward.1} parent=1 // loop_footer_branch
      %12 = sbr.rel target = $region3
    $region8: #{_pe_forward.1} parent=1 // loop_exit
      _
    %655 = vsyncpa [#allocation3], 1
    %s656 = scalar_lea.sflag [#allocation3], 1
    %657 = vsyncpa %s656, 1

</llo_original>
